<compile_context>
chip_gen: v7x
topology: tpu7x:2x2x1
jax: 0.10.0
libtpu: 0.0.40
codegen_flags: <defaults>
</compile_context>

<pallas_src>
import functools

import jax
import jax.numpy as jnp
from jax.experimental import pallas as pl
from jax.experimental.pallas import tpu as pltpu


def _tracking_kernel(t_ref, w_ref, b_ref, x_ref, o_ref):
    # Single fused affine + residual on one (TM, TN) tile:
    #   o = x + tfms @ W12 + b12
    y = jnp.dot(t_ref[...], w_ref[...], preferred_element_type=jnp.float32)
    o_ref[...] = x_ref[...] + y + b_ref[...]


def _round_up(n, m):
    return ((n + m - 1) // m) * m


def _vmem_capacity_bytes():
    try:
        return int(pltpu.get_tpu_info().vmem_capacity_bytes)
    except Exception:
        return 64 << 20  # conservative fallback (v7x per-core figure)


def _select_tiles(m_pad, p_pad, fit_bytes):
    """Pick (TM, TN) — largest legal tiles that fit the VMEM budget."""
    tn = next((c for c in (2048, 1024, 512, 256, 128)
               if p_pad >= c and p_pad % c == 0), p_pad)
    if m_pad <= 256:
        tm = m_pad
    else:
        # m_pad is a multiple of 128 in this branch (see caller), so 128 always works.
        tm = next((c for c in (1024, 512, 256, 128) if m_pad % c == 0), 128)

    def working_set(tm_, tn_):
        # double-buffered x-in + out tiles, tfms tile, weight + bias tiles (f32)
        return (4 * tm_ * tn_ + 2 * tm_ * 16 + 2 * 16 * tn_ + 2 * tn_) * 4

    def halve_tn_ok(tn_):
        return tn_ > 128 and p_pad % (tn_ // 2) == 0

    def halve_tm_ok(tm_):
        h = tm_ // 2
        return tm_ > 8 and h % 8 == 0 and m_pad % h == 0

    while working_set(tm, tn) > fit_bytes and halve_tn_ok(tn):
        tn //= 2
    while working_set(tm, tn) > fit_bytes and halve_tm_ok(tm):
        tm //= 2
    # Guarantee >= 2 blocks on a parallel axis so v7x's 2nd TensorCore isn't idle.
    while (m_pad // tm) * (p_pad // tn) < 2 and halve_tn_ok(tn):
        tn //= 2
    if (m_pad // tm) * (p_pad // tn) < 2 and halve_tm_ok(tm):
        tm //= 2
    return tm, tn


def prepare_tracking_params(w1, b1, w2, b2):
    """Fold fc2 into fc1 once (call at load time, NOT per forward).

    w1: (P, 16) fc1.weight   b1: (P,) fc1.bias
    w2: (P, P)  fc2.weight   b2: (P,) fc2.bias
    Returns (W12, b12) with W12: (16, P_pad), b12: (1, P_pad), where P_pad is
    P rounded up to a multiple of 128 (zero-padded, sliced away after the call).
    """
    w1 = w1.astype(jnp.float32)
    w2 = w2.astype(jnp.float32)
    w12 = w1.T @ w2.T                                              # (16, P)
    b12 = b1.astype(jnp.float32) @ w2.T + b2.astype(jnp.float32)   # (P,)
    p = w12.shape[1]
    p_pad = _round_up(max(p, 128), 128)
    if p_pad != p:
        w12 = jnp.pad(w12, ((0, 0), (0, p_pad - p)))
        b12 = jnp.pad(b12, ((0, p_pad - p),))
    return w12, b12.reshape(1, -1)


def tracking_module_forward(x, tfms, w12, b12, *, image_size, window_size,
                            min_pallas_bytes=1 << 20, force_pallas=False):
    """x: (B, W, img, img); tfms viewable to (B*W, 16); w12/b12 from
    prepare_tracking_params (already lane-padded)."""
    B = x.shape[0]
    P = image_size * image_size
    M = B * window_size
    p_pad = w12.shape[1]            # multiple of 128

    tfms2d = tfms.reshape(M, 16).astype(jnp.float32)
    x2d = x.reshape(M, P).astype(jnp.float32)

    # Tiny problems: a single-block pallas_call's fixed launch/DMA-setup cost
    # dominates; plain jnp (XLA fusion) is as fast or faster.
    if not force_pallas and M * P * 4 < min_pallas_bytes:
        out2d = x2d + tfms2d @ w12[:, :P] + b12[:, :P]
        return out2d.reshape(B, window_size, image_size, image_size)

    m_pad = _round_up(M, 128) if M > 256 else _round_up(M, 8)

    vmem_cap = _vmem_capacity_bytes()
    # Raise scoped VMEM (defaults: 16 MiB v5e / 32 MiB v6e,v7x) but stay well
    # under physical capacity (128 MiB v5e/v6e, 64 MiB/TC v7x).
    vmem_limit = int(max(32 << 20, min(int(0.75 * vmem_cap), 96 << 20)))
    tm, tn = _select_tiles(m_pad, p_pad, int(0.8 * vmem_limit))

    if m_pad != M:
        tfms2d = jnp.pad(tfms2d, ((0, m_pad - M), (0, 0)))
    if m_pad != M or p_pad != P:
        x2d = jnp.pad(x2d, ((0, m_pad - M), (0, p_pad - P)))

    # Grid: weight-column axis (j) OUTER so each weight/bias block is fetched
    # exactly once per call; row axis (i) INNER. Both axes independent.
    grid = (p_pad // tn, m_pad // tm)

    cost = pl.CostEstimate(
        flops=2 * m_pad * 16 * p_pad,
        transcendentals=0,
        bytes_accessed=(2 * m_pad * p_pad + (16 + 1) * p_pad + 16 * m_pad) * 4)

    out2d = pl.pallas_call(
        _tracking_kernel,
        out_shape=jax.ShapeDtypeStruct((m_pad, p_pad), jnp.float32),
        grid=grid,
        in_specs=[
            pl.BlockSpec((tm, 16), lambda j, i: (i, 0)),    # tfms rows
            pl.BlockSpec((16, tn), lambda j, i: (0, j)),    # folded weight cols
            pl.BlockSpec((1, tn), lambda j, i: (0, j)),     # folded bias cols
            pl.BlockSpec((tm, tn), lambda j, i: (i, j)),    # residual x tile
        ],
        out_specs=pl.BlockSpec((tm, tn), lambda j, i: (i, j)),
        compiler_params=pltpu.CompilerParams(
            dimension_semantics=("parallel", "parallel"),
            vmem_limit_bytes=vmem_limit),
        cost_estimate=cost,
    )(tfms2d, w12, b12, x2d)

    out2d = out2d[:M, :P]
    return out2d.reshape(B, window_size, image_size, image_size)


def _reference(x, tfms, w1, b1, w2, b2, *, image_size, window_size):
    """Unfolded reference matching the PyTorch module exactly."""
    B = x.shape[0]
    t = tfms.reshape(B, window_size, -1)
    t = t @ w1.T + b1
    t = t @ w2.T + b2
    t = t.reshape(B, window_size, image_size, image_size)
    return x + t


if __name__ == "__main__":
    image_size = 16        # -> num_pixels P = 256
    window_size = 4
    batch = 2

    P = image_size * image_size
    key = jax.random.PRNGKey(0)
    k1, k2, k3, k4, k5, k6 = jax.random.split(key, 6)

    # Deterministic synthetic parameters (PyTorch-shaped: weight is (out, in)).
    w1 = jax.random.normal(k1, (P, 16), jnp.float32) * 0.05      # fc1.weight
    b1 = jax.random.normal(k2, (P,), jnp.float32) * 0.05         # fc1.bias
    w2 = jax.random.normal(k3, (P, P), jnp.float32) * 0.02       # fc2.weight
    b2 = jax.random.normal(k4, (P,), jnp.float32) * 0.02         # fc2.bias

    # Inputs: x is NCHW with C = window_size; tfms viewable to (B, W, 16).
    x = jax.random.normal(k5, (batch, window_size, image_size, image_size),
                          jnp.float32)
    tfms = jax.random.normal(k6, (batch, window_size, 16), jnp.float32)

    # Fold fc1∘fc2 once, outside the per-call hot path.
    w12, b12 = prepare_tracking_params(w1, b1, w2, b2)

    ref = _reference(x, tfms, w1, b1, w2, b2,
                     image_size=image_size, window_size=window_size)

    # Exercise the Pallas kernel even at this tiny demo size.
    out = tracking_module_forward(
        x, tfms, w12, b12,
        image_size=image_size, window_size=window_size, force_pallas=True)
    out = jax.block_until_ready(out)

    assert out.shape == (batch, window_size, image_size, image_size)
    # The fold changes fp32 summation order slightly; still well within tol.
    assert jnp.allclose(out, ref, atol=1e-4, rtol=1e-4), "pallas mismatch"

    # Also check the small-problem jnp fast path (production dispatch at this size).
    out_fast = tracking_module_forward(
        x, tfms, w12, b12, image_size=image_size, window_size=window_size)
    out_fast = jax.block_until_ready(out_fast)
    assert jnp.allclose(out_fast, ref, atol=1e-4, rtol=1e-4), "fast-path mismatch"

    print("KERNEL_OK")
</pallas_src>

<mosaic_0001>
module attributes {stable_mosaic.version = 11 : i64} {
  func.func @_tracking_kernel(%arg0: i32, %arg1: i32, %arg2: memref<8x16xf32, #tpu.memory_space<vmem>>, %arg3: memref<16x128xf32, #tpu.memory_space<vmem>>, %arg4: memref<1x128xf32, #tpu.memory_space<vmem>>, %arg5: memref<8x128xf32, #tpu.memory_space<vmem>>, %arg6: memref<8x128xf32, #tpu.memory_space<vmem>>) attributes {dimension_semantics = [#tpu.dimension_semantics<parallel>, #tpu.dimension_semantics<parallel>], iteration_bounds = array<i64: 2, 1>, scalar_prefetch = 0 : i64, scratch_operands = 0 : i64, tpu.core_type = #tpu.core_type<tc>, window_params = [{transform_indices = @transform_0, window_bounds = array<i64: 8, 16>}, {transform_indices = @transform_1, window_bounds = array<i64: 16, 128>}, {transform_indices = @transform_2, window_bounds = array<i64: 1, 128>}, {transform_indices = @transform_3, window_bounds = array<i64: 8, 128>}, {transform_indices = @transform_4, window_bounds = array<i64: 8, 128>}]} {
    %c0 = arith.constant 0 : index
    %c0_0 = arith.constant 0 : index
    %0 = vector.load %arg2[%c0, %c0_0] : memref<8x16xf32, #tpu.memory_space<vmem>>, vector<8x16xf32>
    %c0_1 = arith.constant 0 : index
    %c0_2 = arith.constant 0 : index
    %1 = vector.load %arg3[%c0_1, %c0_2] : memref<16x128xf32, #tpu.memory_space<vmem>>, vector<16x128xf32>
    %cst = arith.constant dense<0.000000e+00> : vector<8x128xf32>
    %2 = tpu.matmul %0, %1, %cst {dimension_numbers = #tpu.dot_dimension_numbers<[1], [0], [0], [1], [0, 0, 1, 1], [], []>} : vector<8x16xf32>, vector<16x128xf32>, vector<8x128xf32> -> vector<8x128xf32>
    %c0_3 = arith.constant 0 : index
    %c0_4 = arith.constant 0 : index
    %3 = vector.load %arg5[%c0_3, %c0_4] : memref<8x128xf32, #tpu.memory_space<vmem>>, vector<8x128xf32>
    %4 = arith.addf %3, %2 : vector<8x128xf32>
    %c0_5 = arith.constant 0 : index
    %c0_6 = arith.constant 0 : index
    %5 = vector.load %arg4[%c0_5, %c0_6] : memref<1x128xf32, #tpu.memory_space<vmem>>, vector<1x128xf32>
    %6 = vector.broadcast %5 : vector<1x128xf32> to vector<8x128xf32>
    %7 = arith.addf %4, %6 : vector<8x128xf32>
    %c0_7 = arith.constant 0 : index
    %c0_8 = arith.constant 0 : index
    %8 = vector.load %arg6[%c0_7, %c0_8] : memref<8x128xf32, #tpu.memory_space<vmem>>, vector<8x128xf32>
    tpu.vector_store %arg6[%c0_7, %c0_8], %7 {strides = array<i32>} : memref<8x128xf32, #tpu.memory_space<vmem>>, vector<8x128xf32>,
    return
  }
  func.func @transform_0(%arg0: i32, %arg1: i32) -> (i32, i32) {
    %c0_i32 = arith.constant 0 : i32
    %c0_i32_0 = arith.constant 0 : i32
    return %arg1, %c0_i32 : i32, i32
  }
  func.func @transform_1(%arg0: i32, %arg1: i32) -> (i32, i32) {
    %c0_i32 = arith.constant 0 : i32
    %c0_i32_0 = arith.constant 0 : i32
    return %c0_i32, %arg0 : i32, i32
  }
  func.func @transform_2(%arg0: i32, %arg1: i32) -> (i32, i32) {
    %c0_i32 = arith.constant 0 : i32
    %c0_i32_0 = arith.constant 0 : i32
    return %c0_i32, %arg0 : i32, i32
  }
  func.func @transform_3(%arg0: i32, %arg1: i32) -> (i32, i32) {
    %c0_i32 = arith.constant 0 : i32
    return %arg1, %arg0 : i32, i32
  }
  func.func @transform_4(%arg0: i32, %arg1: i32) -> (i32, i32) {
    %c0_i32 = arith.constant 0 : i32
    return %arg1, %arg0 : i32, i32
  }
}

</mosaic_0001>

<llo_original>
// kernel: tpu_custom_call.1
$region0: #{tpu_custom_call.1}
  #allocation0 [shape = 'u32[]', space=smem, size = 0x4, offset = 0x4, fixed_abs, tag = 'smem constant byte address 0x4 - core index']
  #allocation1 [shape = 'u32[144,128]{1,0:T(1,128)}', space=vmem, size = 0x12000, scoped, tag = 'internal scratch']
  %s0 = inlined_call_operand.hbm [shape: f32[8,16], index: 0, kind: input, shape index: {}]
  %s1 = inlined_call_operand.hbm [shape: f32[16,256], index: 1, kind: input, shape index: {}]
  %s2 = inlined_call_operand.vmem [shape: f32[1,256], index: 2, kind: input, shape index: {}]
  %s3 = inlined_call_operand.hbm [shape: f32[8,256], index: 3, kind: input, shape index: {}]
  %s4 = inlined_call_operand.hbm [shape: f32[8,256], index: 4, kind: output, shape index: {}]
  %s5 = sld [smem:[#allocation0]]
  $region61: #{tpu_custom_call.1} parent=0
    _
  %s7 = ssub.s32 1, %s5
  %s8 = scalar_select 0, %s7, %s5
  $region1: #{tpu_custom_call.1} parent=0
    #allocation2 [shape = 'u8[4096]{0}', space=vmem, size = 0x1000, scoped, tag = 'input window, operand 0, single buffered']
    #allocation3 [shape = 's32[2]{0}', space=sflag, size = 0x8, scoped, tag = 'scoped memory for tpu_custom_call.1']
    #allocation4 [shape = 's32[2]{0}', space=sflag, size = 0x8, scoped, tag = 'scoped memory for tpu_custom_call.1']
    #allocation5 [shape = 'u8[16384]{0}', space=vmem, size = 0x4000, scoped, tag = 'input window, operand 1']
    #allocation6 [shape = 's32[2]{0}', space=sflag, size = 0x8, scoped, tag = 'scoped memory for tpu_custom_call.1']
    #allocation7 [shape = 'u8[8192]{0}', space=vmem, size = 0x2000, scoped, tag = 'input window, operand 3']
    #allocation8 [shape = 'u8[8192]{0}', space=vmem, size = 0x2000, scoped, tag = 'output window, operand 0']
    %9 = vsyncpa [#allocation3], 0
    %10 = vsyncpa [#allocation6], 0
    %s11 = scalar_lea.sflag [#allocation6], 1
    %12 = vsyncpa %s11, 0
    %13 = vsyncpa [#allocation4], 0
    %s14 = scalar_lea.sflag [#allocation4], 1
    %15 = vsyncpa %s14, 0
    loop: start=0, step=1, limit=4
    $region2: #{tpu_custom_call.1} parent=1 // loop_pre_header
      _
    $region3: #{tpu_custom_call.1} parent=1 // loop_header
      %s17 = sphi 0, %s21
      %p18 = scmp.ge.s32.totalorder %s17, 4
      %s24 = sphi 0, %s36
      %s25 = sphi 0, %s32
      %s26 = sphi 0, %s24
      %s27 = sphi 0, %s25
      %s28 = sphi 0, %s26
      %s29 = sphi 0, %s27
      %s39 = sphi 0, %s41
      %s42 = sphi 0, %s39
      %s43 = sphi 0, %s42
      %s59 = sphi 0, %s43
      %s65 = sphi 0, %s67
      %s68 = sphi 0, %s65
      %s69 = sphi 0, %s68
      %s85 = sphi 0, %s69
      %s91 = sphi 0, %s93
      %s94 = sphi 0, %s91
      %s95 = sphi 0, %s94
      %s111 = sphi 0, %s95
      %s119 = sphi 0, %s121
      %s122 = sphi 0, %s119
      %s123 = sphi 0, %s122
      %s139 = sphi 0, %s123
      %s147 = sphi 0, %s149
      %s150 = sphi 0, %s147
      %s151 = sphi 0, %s150
      %s167 = sphi 0, %s151
    $region4: #{tpu_custom_call.1} parent=1 // loop_header_branch
      %20 = sbr.rel (%p18) target = $region8
    $region5: #{tpu_custom_call.1} parent=1 // loop_body
      %s22 = ssub.s32 %s17, 1
      %s23 = ssub.s32 %s17, 2
      %s30 = sadd.s32 1, %s25
      %p31 = scmp.ge.s32.totalorder %s30, 1
      %s32 = scalar_select %p31, 0, %s30
      %s33 = sadd.s32 1, %s24
      %s34 = scalar_select %p31, %s33, %s24
      %p35 = scmp.ge.s32.totalorder %s34, 2
      %s36 = scalar_select %p35, 0, %s34
      %s37 = ssub.s32 %s25, %s32
      %p38 = scmp.eq.s32.totalorder %s37, 0
      %s40 = sadd.s32 %s39, 1
      %s41 = scalar_select %p38, %s39, %s40
      %p44 = pneg %p38
      %p45 = scmp.eq.s32.totalorder %s17, 1
      %p46 = por %p44, %p45
      %p47 = scmp.ne.s32.totalorder %s39, %s42
      %p48 = scmp.eq.s32.totalorder %s17, 0
      %p49 = por %p47, %p48
      %p50 = scmp.ne.s32.totalorder %s39, %s42
      %p51 = scmp.eq.s32.totalorder %s22, 1
      %p52 = por %p50, %p51
      %p53 = scmp.ne.s32.totalorder %s42, %s43
      %p54 = scmp.eq.s32.totalorder %s22, 0
      %p55 = por %p53, %p54
      %p56 = scmp.ne.s32.totalorder %s42, %s43
      %p57 = scmp.eq.s32.totalorder %s23, 1
      %p58 = por %p56, %p57
      %p60 = scmp.ne.s32.totalorder %s43, %s59
      %p61 = scmp.eq.s32.totalorder %s23, 0
      %p62 = por %p60, %p61
      %s63 = ssub.s32 %s24, %s36
      %p64 = scmp.eq.s32.totalorder %s63, 0
      %s66 = sadd.s32 %s65, 1
      %s67 = scalar_select %p64, %s65, %s66
      %p70 = pneg %p64
      %p71 = scmp.eq.s32.totalorder %s17, 1
      %p72 = por %p70, %p71
      %p73 = scmp.ne.s32.totalorder %s65, %s68
      %p74 = scmp.eq.s32.totalorder %s17, 0
      %p75 = por %p73, %p74
      %p76 = scmp.ne.s32.totalorder %s65, %s68
      %p77 = scmp.eq.s32.totalorder %s22, 1
      %p78 = por %p76, %p77
      %p79 = scmp.ne.s32.totalorder %s68, %s69
      %p80 = scmp.eq.s32.totalorder %s22, 0
      %p81 = por %p79, %p80
      %p82 = scmp.ne.s32.totalorder %s68, %s69
      %p83 = scmp.eq.s32.totalorder %s23, 1
      %p84 = por %p82, %p83
      %p86 = scmp.ne.s32.totalorder %s69, %s85
      %p87 = scmp.eq.s32.totalorder %s23, 0
      %p88 = por %p86, %p87
      %s89 = ssub.s32 %s24, %s36
      %p90 = scmp.eq.s32.totalorder %s89, 0
      %s92 = sadd.s32 %s91, 1
      %s93 = scalar_select %p90, %s91, %s92
      %p96 = pneg %p90
      %p97 = scmp.eq.s32.totalorder %s17, 1
      %p98 = por %p96, %p97
      %p99 = scmp.ne.s32.totalorder %s91, %s94
      %p100 = scmp.eq.s32.totalorder %s17, 0
      %p101 = por %p99, %p100
      %p102 = scmp.ne.s32.totalorder %s91, %s94
      %p103 = scmp.eq.s32.totalorder %s22, 1
      %p104 = por %p102, %p103
      %p105 = scmp.ne.s32.totalorder %s94, %s95
      %p106 = scmp.eq.s32.totalorder %s22, 0
      %p107 = por %p105, %p106
      %p108 = scmp.ne.s32.totalorder %s94, %s95
      %p109 = scmp.eq.s32.totalorder %s23, 1
      %p110 = por %p108, %p109
      %p112 = scmp.ne.s32.totalorder %s95, %s111
      %p113 = scmp.eq.s32.totalorder %s23, 0
      %p114 = por %p112, %p113
      %s115 = ssub.s32 %s25, %s32
      %s116 = ssub.s32 %s24, %s36
      %s117 = sor.u32 %s115, %s116
      %p118 = scmp.eq.s32.totalorder %s117, 0
      %s120 = sadd.s32 %s119, 1
      %s121 = scalar_select %p118, %s119, %s120
      %p124 = pneg %p118
      %p125 = scmp.eq.s32.totalorder %s17, 1
      %p126 = por %p124, %p125
      %p127 = scmp.ne.s32.totalorder %s119, %s122
      %p128 = scmp.eq.s32.totalorder %s17, 0
      %p129 = por %p127, %p128
      %p130 = scmp.ne.s32.totalorder %s119, %s122
      %p131 = scmp.eq.s32.totalorder %s22, 1
      %p132 = por %p130, %p131
      %p133 = scmp.ne.s32.totalorder %s122, %s123
      %p134 = scmp.eq.s32.totalorder %s22, 0
      %p135 = por %p133, %p134
      %p136 = scmp.ne.s32.totalorder %s122, %s123
      %p137 = scmp.eq.s32.totalorder %s23, 1
      %p138 = por %p136, %p137
      %p140 = scmp.ne.s32.totalorder %s123, %s139
      %p141 = scmp.eq.s32.totalorder %s23, 0
      %p142 = por %p140, %p141
      %s143 = ssub.s32 %s25, %s32
      %s144 = ssub.s32 %s24, %s36
      %s145 = sor.u32 %s143, %s144
      %p146 = scmp.eq.s32.totalorder %s145, 0
      %s148 = sadd.s32 %s147, 1
      %s149 = scalar_select %p146, %s147, %s148
      %p152 = pneg %p146
      %p153 = scmp.eq.s32.totalorder %s17, 1
      %p154 = por %p152, %p153
      %p155 = scmp.ne.s32.totalorder %s147, %s150
      %p156 = scmp.eq.s32.totalorder %s17, 0
      %p157 = por %p155, %p156
      %p158 = scmp.ne.s32.totalorder %s147, %s150
      %p159 = scmp.eq.s32.totalorder %s22, 1
      %p160 = por %p158, %p159
      %p161 = scmp.ne.s32.totalorder %s150, %s151
      %p162 = scmp.eq.s32.totalorder %s22, 0
      %p163 = por %p161, %p162
      %p164 = scmp.ne.s32.totalorder %s150, %s151
      %p165 = scmp.eq.s32.totalorder %s23, 1
      %p166 = por %p164, %p165
      %p168 = scmp.ne.s32.totalorder %s151, %s167
      %p169 = scmp.eq.s32.totalorder %s23, 0
      %p170 = por %p168, %p169
      %p171 = scmp.le.s32.totalorder 1, %s17
      %p172 = scmp.lt.s32.totalorder %s17, 3
      %p173 = pnand %p171, %p172
      %p174 = pneg %p173
      // Predicated region
      $region9: #{tpu_custom_call.1} parent=5 // pred_check
        _
      $region10: #{tpu_custom_call.1} parent=5 // pred_check_branch
        %176 = sbr.rel (%p173) target = $region12
      $region11: #{tpu_custom_call.1} parent=5 // pred_region
        %s177 = ssub.s32 %s17, 1
        // Predicated region
        $region13: #{tpu_custom_call.1} parent=11 // pred_check
          %p178 = pneg %p55
        $region14: #{tpu_custom_call.1} parent=11 // pred_check_branch
          %180 = sbr.rel (%p178) target = $region16
        $region15: #{tpu_custom_call.1} parent=11 // pred_region
          %s182 = ssub.s32 128, 128
          %183 = vsyncadd [#allocation3], %s182
          %s184 = smul.addr %s27, 128
          %s185 = scalar_lea.hbm %s0, %s184
          %s187 = sshll.u32 [#allocation2], 4
          %s188 = int_to_ptr.vmem [resolvable:$true] %s187
          %190 = dma.hbm_to_vmem [thread:$0]  %s185, 128, %s188, [#allocation3]
        $region16: #{tpu_custom_call.1} parent=11 // pred_fallthru
          _
      $region12: #{tpu_custom_call.1} parent=5 // pred_fallthru
        _
      %p191 = scmp.lt.s32.totalorder %s17, 2
      // Predicated region
      $region17: #{tpu_custom_call.1} parent=5 // pred_check
        %p192 = pneg %p191
      $region18: #{tpu_custom_call.1} parent=5 // pred_check_branch
        %194 = sbr.rel (%p192) target = $region20
      $region19: #{tpu_custom_call.1} parent=5 // pred_region
        // Predicated region
        $region21: #{tpu_custom_call.1} parent=19 // pred_check
          %p195 = pneg %p75
        $region22: #{tpu_custom_call.1} parent=19 // pred_check_branch
          %197 = sbr.rel (%p195) target = $region24
        $region23: #{tpu_custom_call.1} parent=19 // pred_region
          %s198 = sand.u32 %s17, 1
          %s199 = scalar_lea.sflag [#allocation6], %s198
          %s200 = sand.u32 %s65, 1
          %s201 = smul.addr %s200, 16
          %s202 = scalar_lea.vmem [#allocation5], %s201
          %s204 = ssub.s32 256, 256
          %205 = vsyncadd %s199, %s204
          %s206 = smul.addr %s24, 128
          %s207 = scalar_lea.hbm %s1, %s206
          %s208 = sshll.u32 %s202, 4
          %s209 = int_to_ptr.vmem [resolvable:$true] %s208
          %214 = dma.hbm_to_vmem [thread:$0]  %s207, 256, %s209, %s199, 256, 128, 8
        $region24: #{tpu_custom_call.1} parent=19 // pred_fallthru
          _
        // Predicated region
        $region25: #{tpu_custom_call.1} parent=19 // pred_check
          %p215 = pneg %p101
        $region26: #{tpu_custom_call.1} parent=19 // pred_check_branch
          %217 = sbr.rel (%p215) target = $region28
        $region27: #{tpu_custom_call.1} parent=19 // pred_region
          %p218 = scmp.lt.s32.totalorder %s24, 1
          %s219 = scalar_select %p218, %s24, 1
          %s220 = scalar_lea.vmem %s2, %s219
        $region28: #{tpu_custom_call.1} parent=19 // pred_fallthru
          _
        // Predicated region
        $region29: #{tpu_custom_call.1} parent=19 // pred_check
          %p221 = pneg %p129
        $region30: #{tpu_custom_call.1} parent=19 // pred_check_branch
          %223 = sbr.rel (%p221) target = $region32
        $region31: #{tpu_custom_call.1} parent=19 // pred_region
          %s224 = sand.u32 %s17, 1
          %s225 = scalar_lea.sflag [#allocation6], %s224
          %s226 = sand.u32 %s119, 1
          %s227 = smul.addr %s226, 8
          %s228 = scalar_lea.vmem [#allocation7], %s227
          %s230 = ssub.s32 128, 128
          %231 = vsyncadd %s225, %s230
          %s232 = smul.addr %s25, 2
          %s233 = sadd.s32 %s24, %s232
          %s234 = smul.addr %s233, 128
          %s235 = scalar_lea.hbm %s3, %s234
          %s237 = sshll.u32 %s228, 4
          %s238 = int_to_ptr.vmem [resolvable:$true] %s237
          %240 = dma.hbm_to_vmem [thread:$0]  %s235, 128, %s238, %s225
        $region32: #{tpu_custom_call.1} parent=19 // pred_fallthru
          _
      $region20: #{tpu_custom_call.1} parent=5 // pred_fallthru
        _
      %p241 = scmp.le.s32.totalorder 1, %s17
      %p242 = scmp.lt.s32.totalorder %s17, 3
      %p243 = pnand %p241, %p242
      %p244 = pneg %p243
      // Predicated region
      $region33: #{tpu_custom_call.1} parent=5 // pred_check
        _
      $region34: #{tpu_custom_call.1} parent=5 // pred_check_branch
        %246 = sbr.rel (%p243) target = $region36
      $region35: #{tpu_custom_call.1} parent=5 // pred_region
        %s247 = ssub.s32 %s17, 1
        // Predicated region
        $region37: #{tpu_custom_call.1} parent=35 // pred_check
          %p248 = pneg %p55
        $region38: #{tpu_custom_call.1} parent=35 // pred_check_branch
          %250 = sbr.rel (%p248) target = $region40
        $region39: #{tpu_custom_call.1} parent=35 // pred_region
          %251 = dma.done [#allocation3], 128
        $region40: #{tpu_custom_call.1} parent=35 // pred_fallthru
          _
        %s252 = sand.u32 %s22, 1
        %s253 = scalar_lea.sflag [#allocation6], %s252
        %s254 = sand.u32 %s68, 1
        %s255 = smul.addr %s254, 16
        %s256 = scalar_lea.vmem [#allocation5], %s255
        // Predicated region
        $region41: #{tpu_custom_call.1} parent=35 // pred_check
          %p257 = pneg %p81
        $region42: #{tpu_custom_call.1} parent=35 // pred_check_branch
          %259 = sbr.rel (%p257) target = $region44
        $region43: #{tpu_custom_call.1} parent=35 // pred_region
          %260 = dma.done %s253, 256
        $region44: #{tpu_custom_call.1} parent=35 // pred_fallthru
          _
        %s261 = sand.u32 %s22, 1
        %s262 = scalar_lea.sflag [#allocation6], %s261
        %s263 = sand.u32 %s122, 1
        %s264 = smul.addr %s263, 8
        %s265 = scalar_lea.vmem [#allocation7], %s264
        // Predicated region
        $region45: #{tpu_custom_call.1} parent=35 // pred_check
          %p266 = pneg %p135
        $region46: #{tpu_custom_call.1} parent=35 // pred_check_branch
          %268 = sbr.rel (%p266) target = $region48
        $region47: #{tpu_custom_call.1} parent=35 // pred_region
          %269 = dma.done %s262, 128
        $region48: #{tpu_custom_call.1} parent=35 // pred_fallthru
          _
        %p270 = pneg %p55
        %p271 = pneg %p52
        %s272 = sand.u32 %s22, 1
        %s273 = scalar_lea.sflag [#allocation6], %s272
        %s274 = sand.u32 %s68, 1
        %s275 = smul.addr %s274, 16
        %s276 = scalar_lea.vmem [#allocation5], %s275
        %p277 = pneg %p81
        %p278 = pneg %p78
        %p279 = scmp.lt.s32.totalorder %s26, 1
        %s280 = scalar_select %p279, %s26, 1
        %s281 = scalar_lea.vmem %s2, %s280
        %p282 = pneg %p107
        %p283 = pneg %p104
        %s284 = sand.u32 %s22, 1
        %s285 = scalar_lea.sflag [#allocation6], %s284
        %s286 = sand.u32 %s122, 1
        %s287 = smul.addr %s286, 8
        %s288 = scalar_lea.vmem [#allocation7], %s287
        %p289 = pneg %p135
        %p290 = pneg %p132
        %p291 = pneg %p163
        %p292 = pneg %p160
        %s293 = sand.u32 %s150, 1
        %s294 = scalar_lea.sflag [#allocation4], %s293
        %s295 = sand.u32 %s150, 1
        %s296 = smul.addr %s295, 8
        %s297 = scalar_lea.vmem [#allocation8], %s296
        %p298 = scmp.lt.s32.totalorder %s26, 1
        %s299 = scalar_select %p298, %s26, 1
        %s300 = scalar_lea.vmem %s2, %s299
        %v301 = vld [vmem:[#allocation2] sm:$0xff]
        %v302 = vld [vmem:[%s256] sm:$0xff]
        %v303 = vld [vmem:[%s256 + $0x8] sm:$0xff]
        %vm304 = vcmask 130048
        %v306 = vsel %vm304, %v301, 0
        %308 = vmatprep.subr.mxu0 0.0
        %309 = vmatpush1.msra.mxu0 %v302
        %310 = vmatprep.subr.mxu0 0.0
        %311 = vmatpush1.msra.mxu0 %v303
        %312 = vmatprep.subr.mxu0 0.0
        %313 = vmatpush1.msra.mxu0 0.0
        %314 = vmatprep.subr.mxu0 0.0
        %315 = vmatpush1.msra.mxu0 0.0
        %316 = vmatprep.subr.mxu0 0.0
        %317 = vmatpush1.msra.mxu0 0.0
        %318 = vmatprep.subr.mxu0 0.0
        %319 = vmatpush1.msra.mxu0 0.0
        %320 = vmatprep.subr.mxu0 0.0
        %321 = vmatpush1.msra.mxu0 0.0
        %322 = vmatprep.subr.mxu0 0.0
        %323 = vmatpush1.msra.mxu0 0.0
        %324 = vmatprep.subr.mxu0 0.0
        %325 = vmatpush1.msra.mxu0 0.0
        %326 = vmatprep.subr.mxu0 0.0
        %327 = vmatpush1.msra.mxu0 0.0
        %328 = vmatprep.subr.mxu0 0.0
        %329 = vmatpush1.msra.mxu0 0.0
        %330 = vmatprep.subr.mxu0 0.0
        %331 = vmatpush1.msra.mxu0 0.0
        %332 = vmatprep.subr.mxu0 0.0
        %333 = vmatpush1.msra.mxu0 0.0
        %334 = vmatprep.subr.mxu0 0.0
        %335 = vmatpush1.msra.mxu0 0.0
        %336 = vmatprep.subr.mxu0 0.0
        %337 = vmatpush1.msra.mxu0 0.0
        %338 = vmatprep.subr.mxu0 0.0
        %339 = vmatpush1.msra.mxu0 0.0
        %340 = vmatprep.subr.mxu0 0.0
        %341 = vmatpush1.msra.mxu0 0.0
        %342 = vmatprep.subr.mxu0 0.0
        %343 = vmatpush1.msra.mxu0 0.0
        %344 = vmatprep.subr.mxu0 0.0
        %345 = vmatpush1.msra.mxu0 0.0
        %346 = vmatprep.subr.mxu0 0.0
        %347 = vmatpush1.msra.mxu0 0.0
        %348 = vmatprep.subr.mxu0 0.0
        %349 = vmatpush1.msra.mxu0 0.0
        %350 = vmatprep.subr.mxu0 0.0
        %351 = vmatpush1.msra.mxu0 0.0
        %352 = vmatprep.subr.mxu0 0.0
        %353 = vmatpush1.msra.mxu0 0.0
        %354 = vmatprep.subr.mxu0 0.0
        %355 = vmatpush1.msra.mxu0 0.0
        %356 = vmatprep.subr.mxu0 0.0
        %357 = vmatpush1.msra.mxu0 0.0
        %358 = vmatprep.subr.mxu0 0.0
        %359 = vmatpush1.msra.mxu0 0.0
        %360 = vmatprep.subr.mxu0 0.0
        %361 = vmatpush1.msra.mxu0 0.0
        %362 = vmatprep.subr.mxu0 0.0
        %363 = vmatpush1.msra.mxu0 0.0
        %364 = vmatprep.subr.mxu0 0.0
        %365 = vmatpush1.msra.mxu0 0.0
        %366 = vmatprep.subr.mxu0 0.0
        %367 = vmatpush1.msra.mxu0 0.0
        %368 = vmatprep.subr.mxu0 0.0
        %369 = vmatpush1.msra.mxu0 0.0
        %370 = vmatprep.subr.mxu0 0.0
        %371 = vmatpush1.msra.mxu0 0.0
        %372 = vmatprep.mubr.f32.mxu0 0.0
        %373 = vmatmul.mubr.f32.gmra.mrb[0].mxu0 %v306
        %v374 = vpop.f32.mrb[0].mxu0
        %v375 = vadd.f32 0.0, %v374
        %v376 = vpop.f32.mrb[0].mxu0
        %377 = vdwg.mxu0
        %v378 = vld [vmem:[%s265] sm:$0xff]
        %v379 = vadd.f32 %v378, %v375
        %v380 = vld [vmem:[%s300] sm:$0x1]
        %v382 = vlaneseq
        %v383 = vshrl.u32 %v382, 7
        %v384 = vsub.s32 0, %v383
        %v385 = vrot.slane %v380, %v384
        %v387 = vadd.f32 %v379, %v385
        %388 = vst [vmem:[%s297] sm:$0xff] %v387
        %s389 = sand.u32 %s150, 1
        %s390 = scalar_lea.sflag [#allocation4], %s389
        %s391 = sand.u32 %s150, 1
        %s392 = smul.addr %s391, 8
        %s393 = scalar_lea.vmem [#allocation8], %s392
        // Predicated region
        $region49: #{tpu_custom_call.1} parent=35 // pred_check
          %p394 = pneg %p160
        $region50: #{tpu_custom_call.1} parent=35 // pred_check_branch
          %396 = sbr.rel (%p394) target = $region52
        $region51: #{tpu_custom_call.1} parent=35 // pred_region
          %s398 = ssub.s32 128, 128
          %399 = vsyncadd %s390, %s398
          %s400 = smul.addr %s27, 2
          %s401 = sadd.s32 %s26, %s400
          %s402 = smul.addr %s401, 128
          %s403 = scalar_lea.hbm %s4, %s402
          %s405 = sshll.u32 %s393, 4
          %s406 = int_to_ptr.vmem [resolvable:$true] %s405
          %408 = dma.vmem_to_hbm [thread:$0]  %s406, 128, %s403, %s390
        $region52: #{tpu_custom_call.1} parent=35 // pred_fallthru
          _
      $region36: #{tpu_custom_call.1} parent=5 // pred_fallthru
        _
      %p409 = scmp.le.s32.totalorder 2, %s17
      // Predicated region
      $region53: #{tpu_custom_call.1} parent=5 // pred_check
        %p410 = pneg %p409
      $region54: #{tpu_custom_call.1} parent=5 // pred_check_branch
        %412 = sbr.rel (%p410) target = $region56
      $region55: #{tpu_custom_call.1} parent=5 // pred_region
        %s413 = ssub.s32 %s17, 2
        // Predicated region
        $region57: #{tpu_custom_call.1} parent=55 // pred_check
          %p414 = pneg %p166
        $region58: #{tpu_custom_call.1} parent=55 // pred_check_branch
          %416 = sbr.rel (%p414) target = $region60
        $region59: #{tpu_custom_call.1} parent=55 // pred_region
          %s417 = sand.u32 %s151, 1
          %s418 = scalar_lea.sflag [#allocation4], %s417
          %s419 = sand.u32 %s151, 1
          %s420 = smul.addr %s419, 8
          %s421 = scalar_lea.vmem [#allocation8], %s420
          %422 = dma.done %s418, 128
        $region60: #{tpu_custom_call.1} parent=55 // pred_fallthru
          _
      $region56: #{tpu_custom_call.1} parent=5 // pred_fallthru
        _
    $region6: #{tpu_custom_call.1} parent=1 // loop_footer
      %s21 = sadd.s32 1, %s17
    $region7: #{tpu_custom_call.1} parent=1 // loop_footer_branch
      %16 = sbr.rel target = $region3
    $region8: #{tpu_custom_call.1} parent=1 // loop_exit
      _
    %423 = vsyncpa [#allocation3], 1
    %s424 = scalar_lea.sflag [#allocation3], 1
    %425 = vsyncpa %s424, 1
    %426 = vsyncpa [#allocation6], 1
    %s427 = scalar_lea.sflag [#allocation6], 1
    %428 = vsyncpa %s427, 1
    %429 = vsyncpa [#allocation4], 1
    %s430 = scalar_lea.sflag [#allocation4], 1
    %431 = vsyncpa %s430, 1

</llo_original>
